<compile_context>
chip_gen: v7x
topology: tpu7x:2x2x1
jax: 0.10.0
libtpu: 0.0.40
codegen_flags: <defaults>
</compile_context>

<pallas_src>
import functools

import jax
import jax.numpy as jnp
from jax.experimental import pallas as pl
from jax.experimental.pallas import tpu as pltpu


def _round_up(n, m):
    return ((n + m - 1) // m) * m


def _pad_lanes(w, hp):
    """Zero-pad the last (lane) dimension up to hp."""
    h = w.shape[-1]
    if hp == h:
        return w
    return jnp.pad(w, ((0, 0), (0, hp - h)))


def _choose_b_tile(B, T, D, Hp, x_itemsize, mm_itemsize, vmem_budget_bytes):
    """Largest multiple-of-8 batch tile whose per-step live VMEM fits the budget."""
    bytes_per_row = (
        2 * T * D * x_itemsize      # x tile (the pipeline double-buffers inputs)
        + T * D * mm_itemsize       # bf16 copy of the x tile fed to the MXU
        + T * 2 * Hp * 4            # fused k|v projection, f32
        + 2 * T * Hp * 4            # k*q / a*v_in broadcast temporaries, f32
        + 2 * (Hp + T) * 4          # v / a output tiles (double-buffered)
    )
    # Weights + biases; counted double-buffered (their index_map is constant, but we
    # budget conservatively instead of relying on pipeline_mode=pl.Buffered(1)).
    fixed = 2 * (3 * D * Hp * mm_itemsize + 3 * Hp * 4)
    avail = max(vmem_budget_bytes - fixed, 8 * bytes_per_row)
    bt = max(8, min(128, (avail // bytes_per_row) // 8 * 8))
    if B >= 16:
        # At least two grid steps so the "parallel" batch axis can shard across both
        # TensorCores on v7x (single-TC v5e/v6e are unaffected).
        bt = min(bt, _round_up((B + 1) // 2, 8))
    if bt >= B:
        bt = B  # one block spanning the whole batch (block == full dim is always legal)
    return int(bt)


def _final_attention_kernel(x_ref, wq_ref, bq_ref, wkv_ref, bkv_ref,
                            v_out_ref, a_out_ref):
    # x_ref: (bt, T, D); wq_ref: (D, Hp) bf16; bq_ref: (1, Hp) f32
    # wkv_ref: (D, 2*Hp) bf16; bkv_ref: (1, 2*Hp) f32
    bt, T, D = x_ref.shape
    Hp = v_out_ref.shape[-1]
    mm_dtype = wq_ref.dtype

    x = x_ref[...]                                         # (bt, T, D)
    x_mm = x.astype(mm_dtype)

    # ---- q: project only the time-mean (mean in f32, matmul in bf16/f32-acc) ----
    xm = jnp.mean(x.astype(jnp.float32), axis=1)           # (bt, D) f32
    q = jnp.dot(xm.astype(mm_dtype), wq_ref[...],
                preferred_element_type=jnp.float32)
    q = q + bq_ref[...]                                    # (bt, Hp); padded lanes are 0

    # ---- fused k|v projection: one MXU pass with N = 2*Hp ----
    # NOTE: reshape is a free layout change when T % 8 == 0 (sublane merge); for
    # T % 8 != 0 it is an in-VMEM repack (still no extra HBM traffic).
    x2d = x_mm.reshape(bt * T, D)
    kv = jnp.dot(x2d, wkv_ref[...], preferred_element_type=jnp.float32)
    kv = kv + bkv_ref[...]                                 # (bt*T, 2*Hp)
    kv = kv.reshape(bt, T, 2 * Hp)
    k = kv[:, :, 0:Hp]                                     # lane-tile-aligned view
    v_in = kv[:, :, Hp:2 * Hp]                             # lane-tile-aligned view

    # attention logits: VPU multiply + lane (XLU) reduce; padded lanes contribute 0
    e = jnp.sum(k * q[:, None, :], axis=-1)                # (bt, T)

    # softmax over time, f32
    m = jnp.max(e, axis=-1, keepdims=True)
    p = jnp.exp(e - m)
    denom = jnp.sum(p, axis=-1, keepdims=True)
    r = pl.reciprocal(denom, approx=True)                  # EUP slot
    r = r * (2.0 - denom * r)                              # one Newton step -> ~f32 accuracy
    a = p * r                                              # (bt, T)

    # weighted sum of values: VPU multiply + sublane reduce
    v = jnp.sum(a[:, :, None] * v_in, axis=1)              # (bt, Hp)

    v_out_ref[...] = v
    a_out_ref[...] = a


@functools.partial(jax.jit, static_argnames=("matmul_dtype",))
def final_attention_qkv(x, wq_t, bq, wk_t, bk, wv_t, bv,
                        matmul_dtype=jnp.bfloat16):
    """x: (B, T, D); w*_t: (D, H) (transposed PyTorch weights); b*: (1, H)."""
    B, T, D = x.shape
    H = wq_t.shape[1]
    Hp = _round_up(H, 128)

    # Lane-aligned (Hp) packing: q weight separate, k|v fused.
    wq_p = _pad_lanes(wq_t, Hp).astype(matmul_dtype)                        # (D, Hp)
    bq_p = _pad_lanes(bq, Hp).astype(jnp.float32)                           # (1, Hp)
    wkv_p = jnp.concatenate(
        [_pad_lanes(wk_t, Hp), _pad_lanes(wv_t, Hp)], axis=1
    ).astype(matmul_dtype)                                                  # (D, 2*Hp)
    bkv_p = jnp.concatenate(
        [_pad_lanes(bk, Hp), _pad_lanes(bv, Hp)], axis=1
    ).astype(jnp.float32)                                                   # (1, 2*Hp)

    vmem_budget = 20 * 1024 * 1024
    b_tile = _choose_b_tile(B, T, D, Hp,
                            x_itemsize=x.dtype.itemsize,
                            mm_itemsize=jnp.dtype(matmul_dtype).itemsize,
                            vmem_budget_bytes=vmem_budget)
    grid = (pl.cdiv(B, b_tile),)   # no x padding; last block may be partial

    v_out, a_out = pl.pallas_call(
        _final_attention_kernel,
        out_shape=(
            jax.ShapeDtypeStruct((B, Hp), jnp.float32),
            jax.ShapeDtypeStruct((B, T), jnp.float32),
        ),
        grid_spec=pltpu.PrefetchScalarGridSpec(
            num_scalar_prefetch=0,
            grid=grid,
            in_specs=[
                pl.BlockSpec((b_tile, T, D), lambda i: (i, 0, 0)),
                pl.BlockSpec((D, Hp), lambda i: (0, 0)),
                pl.BlockSpec((1, Hp), lambda i: (0, 0)),
                pl.BlockSpec((D, 2 * Hp), lambda i: (0, 0)),
                pl.BlockSpec((1, 2 * Hp), lambda i: (0, 0)),
            ],
            out_specs=[
                pl.BlockSpec((b_tile, Hp), lambda i: (i, 0)),
                pl.BlockSpec((b_tile, T), lambda i: (i, 0)),
            ],
        ),
        compiler_params=pltpu.CompilerParams(
            dimension_semantics=("parallel",),
            vmem_limit_bytes=32 * 1024 * 1024,
        ),
    )(x, wq_p, bq_p, wkv_p, bkv_p)

    if Hp != H:
        v_out = v_out[:, :H]   # trim lane padding outside the kernel (tiny copy)
    return v_out, a_out


def _kaiming_uniform(key, shape, fan_in):
    # Matches nn.init.kaiming_uniform_(w, a=sqrt(5)): bound = 1/sqrt(fan_in)
    bound = 1.0 / jnp.sqrt(fan_in)
    return jax.random.uniform(key, shape, jnp.float32, -bound, bound)


def _ref_forward(x, wq_t, bq, wk_t, bk, wv_t, bv, matmul_dtype=jnp.bfloat16):
    # Pure-JAX reference for the mask=None forward path, with the same matmul
    # operand dtype as the kernel so the comparison isolates kernel logic.
    xm = jnp.mean(x, axis=1)
    q = jnp.dot(xm.astype(matmul_dtype), wq_t.astype(matmul_dtype),
                preferred_element_type=jnp.float32) + bq[0]            # (B, H)
    k = jnp.dot(x.astype(matmul_dtype), wk_t.astype(matmul_dtype),
                preferred_element_type=jnp.float32) + bk[0]            # (B, T, H)
    v_in = jnp.dot(x.astype(matmul_dtype), wv_t.astype(matmul_dtype),
                   preferred_element_type=jnp.float32) + bv[0]         # (B, T, H)
    e = jnp.einsum("bth,bh->bt", k, q)                                 # (B, T)
    a = jax.nn.softmax(e, axis=1)                                      # (B, T)
    v = jnp.einsum("bt,bth->bh", a, v_in)                              # (B, H)
    return v, a


if __name__ == "__main__":
    # Small shapes consistent with the module: (batch, time_step, attention_input_dim)
    B, T, D, H = 4, 8, 32, 32

    key = jax.random.PRNGKey(0)
    kx, kwq, kbq, kwk, kbk, kwv, kbv = jax.random.split(key, 7)

    x = jax.random.normal(kx, (B, T, D), jnp.float32)

    # Deterministic parameter init (kaiming-uniform weights, uniform biases, like nn.Linear).
    wq_t = _kaiming_uniform(kwq, (D, H), fan_in=D)        # transposed W_q
    wk_t = _kaiming_uniform(kwk, (D, H), fan_in=D)
    wv_t = _kaiming_uniform(kwv, (D, H), fan_in=D)
    b_bound = 1.0 / jnp.sqrt(D)
    bq = jax.random.uniform(kbq, (1, H), jnp.float32, -b_bound, b_bound)
    bk = jax.random.uniform(kbk, (1, H), jnp.float32, -b_bound, b_bound)
    bv = jax.random.uniform(kbv, (1, H), jnp.float32, -b_bound, b_bound)

    v_out, a_out = final_attention_qkv(x, wq_t, bq, wk_t, bk, wv_t, bv)
    jax.block_until_ready((v_out, a_out))

    v_ref, a_ref = _ref_forward(x, wq_t, bq, wk_t, bk, wv_t, bv)
    assert v_out.shape == (B, H) and a_out.shape == (B, T)
    # Kernel and reference share the same bf16 operand rounding and f32 accumulation;
    # the remaining slack covers accumulation-order differences and the EUP
    # approx-reciprocal (refined with one Newton step) in the softmax.
    assert jnp.allclose(v_out, v_ref, atol=2e-3, rtol=2e-3)
    assert jnp.allclose(a_out, a_ref, atol=2e-3, rtol=2e-3)

    print("KERNEL_OK")
</pallas_src>

<mosaic_0001>
module attributes {stable_mosaic.version = 11 : i64} {
  func.func @_final_attention_kernel(%arg0: i32, %arg1: memref<4x8x32xf32, #tpu.memory_space<vmem>>, %arg2: memref<32x128xbf16, #tpu.memory_space<vmem>>, %arg3: memref<1x128xf32, #tpu.memory_space<vmem>>, %arg4: memref<32x256xbf16, #tpu.memory_space<vmem>>, %arg5: memref<1x256xf32, #tpu.memory_space<vmem>>, %arg6: memref<4x128xf32, #tpu.memory_space<vmem>>, %arg7: memref<4x8xf32, #tpu.memory_space<vmem>>) attributes {dimension_semantics = [#tpu.dimension_semantics<parallel>], iteration_bounds = array<i64: 1>, scalar_prefetch = 0 : i64, scratch_operands = 0 : i64, tpu.core_type = #tpu.core_type<tc>, window_params = [{transform_indices = @transform_0, window_bounds = array<i64: 4, 8, 32>}, {pipeline_mode = #tpu.pipeline_mode<synchronous>, transform_indices = @transform_1, window_bounds = array<i64: 32, 128>}, {pipeline_mode = #tpu.pipeline_mode<synchronous>, transform_indices = @transform_2, window_bounds = array<i64: 1, 128>}, {pipeline_mode = #tpu.pipeline_mode<synchronous>, transform_indices = @transform_3, window_bounds = array<i64: 32, 256>}, {pipeline_mode = #tpu.pipeline_mode<synchronous>, transform_indices = @transform_4, window_bounds = array<i64: 1, 256>}, {transform_indices = @transform_5, window_bounds = array<i64: 4, 128>}, {transform_indices = @transform_6, window_bounds = array<i64: 4, 8>}]} {
    %c0 = arith.constant 0 : index
    %c0_0 = arith.constant 0 : index
    %c0_1 = arith.constant 0 : index
    %0 = vector.load %arg1[%c0, %c0_0, %c0_1] : memref<4x8x32xf32, #tpu.memory_space<vmem>>, vector<4x8x32xf32>
    %1 = arith.truncf %0 : vector<4x8x32xf32> to vector<4x8x32xbf16>
    %cst = arith.constant dense<0.000000e+00> : vector<4x32xf32>
    %2 = vector.multi_reduction <add>, %0, %cst [1] : vector<4x8x32xf32> to vector<4x32xf32>
    %cst_2 = arith.constant 8.000000e+00 : f32
    %3 = vector.broadcast %cst_2 : f32 to vector<4x32xf32>
    %4 = arith.divf %2, %3 : vector<4x32xf32>
    %5 = arith.truncf %4 : vector<4x32xf32> to vector<4x32xbf16>
    %c0_3 = arith.constant 0 : index
    %c0_4 = arith.constant 0 : index
    %6 = vector.load %arg2[%c0_3, %c0_4] : memref<32x128xbf16, #tpu.memory_space<vmem>>, vector<32x128xbf16>
    %cst_5 = arith.constant dense<0.000000e+00> : vector<4x128xf32>
    %7 = tpu.matmul %5, %6, %cst_5 {dimension_numbers = #tpu.dot_dimension_numbers<[1], [0], [0], [1], [0, 0, 1, 1], [], []>} : vector<4x32xbf16>, vector<32x128xbf16>, vector<4x128xf32> -> vector<4x128xf32>
    %c0_6 = arith.constant 0 : index
    %c0_7 = arith.constant 0 : index
    %8 = vector.load %arg3[%c0_6, %c0_7] : memref<1x128xf32, #tpu.memory_space<vmem>>, vector<1x128xf32>
    %9 = vector.broadcast %8 : vector<1x128xf32> to vector<4x128xf32>
    %10 = arith.addf %7, %9 : vector<4x128xf32>
    %11 = vector.shape_cast %1 : vector<4x8x32xbf16> to vector<32x32xbf16>
    %c0_8 = arith.constant 0 : index
    %c0_9 = arith.constant 0 : index
    %12 = vector.load %arg4[%c0_8, %c0_9] : memref<32x256xbf16, #tpu.memory_space<vmem>>, vector<32x256xbf16>
    %cst_10 = arith.constant dense<0.000000e+00> : vector<32x256xf32>
    %13 = tpu.matmul %11, %12, %cst_10 {dimension_numbers = #tpu.dot_dimension_numbers<[1], [0], [0], [1], [0, 0, 1, 1], [], []>} : vector<32x32xbf16>, vector<32x256xbf16>, vector<32x256xf32> -> vector<32x256xf32>
    %c0_11 = arith.constant 0 : index
    %c0_12 = arith.constant 0 : index
    %14 = vector.load %arg5[%c0_11, %c0_12] : memref<1x256xf32, #tpu.memory_space<vmem>>, vector<1x256xf32>
    %15 = vector.broadcast %14 : vector<1x256xf32> to vector<32x256xf32>
    %16 = arith.addf %13, %15 : vector<32x256xf32>
    %17 = vector.shape_cast %16 : vector<32x256xf32> to vector<4x8x256xf32>
    %18 = vector.extract_strided_slice %17 {offsets = [0, 0, 0], sizes = [4, 8, 128], strides = [1, 1, 1]} : vector<4x8x256xf32> to vector<4x8x128xf32>
    %19 = vector.extract_strided_slice %17 {offsets = [0, 0, 128], sizes = [4, 8, 128], strides = [1, 1, 1]} : vector<4x8x256xf32> to vector<4x8x128xf32>
    %20 = vector.shape_cast %10 : vector<4x128xf32> to vector<4x1x128xf32>
    %21 = vector.broadcast %20 : vector<4x1x128xf32> to vector<4x8x128xf32>
    %22 = arith.mulf %18, %21 : vector<4x8x128xf32>
    %cst_13 = arith.constant dense<0.000000e+00> : vector<4x8xf32>
    %23 = vector.multi_reduction <add>, %22, %cst_13 [2] : vector<4x8x128xf32> to vector<4x8xf32>
    %cst_14 = arith.constant dense<0xFF800000> : vector<4xf32>
    %24 = vector.multi_reduction <maximumf>, %23, %cst_14 [1] : vector<4x8xf32> to vector<4xf32>
    %25 = vector.shape_cast %24 : vector<4xf32> to vector<4x1xf32>
    %26 = vector.broadcast %25 : vector<4x1xf32> to vector<4x8xf32>
    %27 = arith.subf %23, %26 : vector<4x8xf32>
    %28 = math.exp %27 : vector<4x8xf32>
    %cst_15 = arith.constant dense<0.000000e+00> : vector<4xf32>
    %29 = vector.multi_reduction <add>, %28, %cst_15 [1] : vector<4x8xf32> to vector<4xf32>
    %30 = vector.shape_cast %29 : vector<4xf32> to vector<4x1xf32>
    %31 = tpu.reciprocal %30 {approx = true} : vector<4x1xf32> -> vector<4x1xf32>
    %32 = arith.mulf %30, %31 : vector<4x1xf32>
    %cst_16 = arith.constant 2.000000e+00 : f32
    %33 = vector.broadcast %cst_16 : f32 to vector<4x1xf32>
    %34 = arith.subf %33, %32 : vector<4x1xf32>
    %35 = arith.mulf %31, %34 : vector<4x1xf32>
    %36 = vector.broadcast %35 : vector<4x1xf32> to vector<4x8xf32>
    %37 = arith.mulf %28, %36 : vector<4x8xf32>
    %38 = vector.shape_cast %37 : vector<4x8xf32> to vector<4x8x1xf32>
    %39 = vector.broadcast %38 : vector<4x8x1xf32> to vector<4x8x128xf32>
    %40 = arith.mulf %39, %19 : vector<4x8x128xf32>
    %cst_17 = arith.constant dense<0.000000e+00> : vector<4x128xf32>
    %41 = vector.multi_reduction <add>, %40, %cst_17 [1] : vector<4x8x128xf32> to vector<4x128xf32>
    %c0_18 = arith.constant 0 : index
    %c0_19 = arith.constant 0 : index
    %42 = vector.load %arg6[%c0_18, %c0_19] : memref<4x128xf32, #tpu.memory_space<vmem>>, vector<4x128xf32>
    tpu.vector_store %arg6[%c0_18, %c0_19], %41 {strides = array<i32>} : memref<4x128xf32, #tpu.memory_space<vmem>>, vector<4x128xf32>,
    %c0_20 = arith.constant 0 : index
    %c0_21 = arith.constant 0 : index
    %43 = vector.load %arg7[%c0_20, %c0_21] : memref<4x8xf32, #tpu.memory_space<vmem>>, vector<4x8xf32>
    tpu.vector_store %arg7[%c0_20, %c0_21], %37 {strides = array<i32>} : memref<4x8xf32, #tpu.memory_space<vmem>>, vector<4x8xf32>,
    return
  }
  func.func @transform_0(%arg0: i32) -> (i32, i32, i32) {
    %c0_i32 = arith.constant 0 : i32
    %c0_i32_0 = arith.constant 0 : i32
    %c0_i32_1 = arith.constant 0 : i32
    return %arg0, %c0_i32, %c0_i32_0 : i32, i32, i32
  }
  func.func @transform_1(%arg0: i32) -> (i32, i32) {
    %c0_i32 = arith.constant 0 : i32
    %c0_i32_0 = arith.constant 0 : i32
    %c0_i32_1 = arith.constant 0 : i32
    return %c0_i32, %c0_i32_0 : i32, i32
  }
  func.func @transform_2(%arg0: i32) -> (i32, i32) {
    %c0_i32 = arith.constant 0 : i32
    %c0_i32_0 = arith.constant 0 : i32
    %c0_i32_1 = arith.constant 0 : i32
    return %c0_i32, %c0_i32_0 : i32, i32
  }
  func.func @transform_3(%arg0: i32) -> (i32, i32) {
    %c0_i32 = arith.constant 0 : i32
    %c0_i32_0 = arith.constant 0 : i32
    %c0_i32_1 = arith.constant 0 : i32
    return %c0_i32, %c0_i32_0 : i32, i32
  }
  func.func @transform_4(%arg0: i32) -> (i32, i32) {
    %c0_i32 = arith.constant 0 : i32
    %c0_i32_0 = arith.constant 0 : i32
    %c0_i32_1 = arith.constant 0 : i32
    return %c0_i32, %c0_i32_0 : i32, i32
  }
  func.func @transform_5(%arg0: i32) -> (i32, i32) {
    %c0_i32 = arith.constant 0 : i32
    %c0_i32_0 = arith.constant 0 : i32
    return %arg0, %c0_i32 : i32, i32
  }
  func.func @transform_6(%arg0: i32) -> (i32, i32) {
    %c0_i32 = arith.constant 0 : i32
    %c0_i32_0 = arith.constant 0 : i32
    return %arg0, %c0_i32 : i32, i32
  }
}

</mosaic_0001>

<llo_original>
// kernel: final_attention_qkv.1
$region0: #{final_attention_qkv.1}
  #allocation0 [shape = 'u32[]', space=smem, size = 0x4, offset = 0x4, fixed_abs, tag = 'smem constant byte address 0x4 - core index']
  #allocation1 [shape = 'u32[144,128]{1,0:T(1,128)}', space=vmem, size = 0x12000, scoped, tag = 'internal scratch']
  %s0 = inlined_call_operand.vmem [shape: f32[4,8,32], index: 0, kind: input, shape index: {}]
  %s1 = inlined_call_operand.vmem [shape: bf16[32,128], index: 1, kind: input, shape index: {}]
  %s2 = inlined_call_operand.vmem [shape: f32[1,128], index: 2, kind: input, shape index: {}]
  %s3 = inlined_call_operand.vmem [shape: bf16[32,256], index: 3, kind: input, shape index: {}]
  %s4 = inlined_call_operand.vmem [shape: f32[1,256], index: 4, kind: input, shape index: {}]
  %s5 = inlined_call_operand.hbm [shape: f32[4,128], index: 5, kind: output, shape index: {0}]
  %s6 = inlined_call_operand.hbm [shape: f32[4,8], index: 6, kind: output, shape index: {1}]
  %7 = xla_tuple %s5, %s6
  %s8 = sld [smem:[#allocation0]]
  $region38: #{final_attention_qkv.1} parent=0
    _
  %s10 = ssub.s32 1, %s8
  %s11 = scalar_select 0, %s10, %s8
  $region1: #{final_attention_qkv.1} parent=0
    #allocation2 [shape = 'u8[2048]{0}', space=vmem, size = 0x800, scoped, tag = 'output window, operand 0, single buffered']
    #allocation3 [shape = 's32[1]{0}', space=sflag, size = 0x4, scoped, tag = 'scoped memory for final_attention_qkv.1']
    #allocation4 [shape = 'u8[2048]{0}', space=vmem, size = 0x800, scoped, tag = 'output window, operand 1, single buffered']
    #allocation5 [shape = 's32[1]{0}', space=sflag, size = 0x4, scoped, tag = 'scoped memory for final_attention_qkv.1']
    %12 = vsyncpa [#allocation3], 0
    %13 = vsyncpa [#allocation5], 0
    // Predicated region
    $region2: #{final_attention_qkv.1} parent=1 // pred_check
      _
    $region3: #{final_attention_qkv.1} parent=1 // pred_check_branch
      %15 = sbr.rel (0) target = $region5
    $region4: #{final_attention_qkv.1} parent=1 // pred_region
      _
    $region5: #{final_attention_qkv.1} parent=1 // pred_fallthru
      _
    // Predicated region
    $region6: #{final_attention_qkv.1} parent=1 // pred_check
      _
    $region7: #{final_attention_qkv.1} parent=1 // pred_check_branch
      %17 = sbr.rel (0) target = $region9
    $region8: #{final_attention_qkv.1} parent=1 // pred_region
      _
    $region9: #{final_attention_qkv.1} parent=1 // pred_fallthru
      _
    // Predicated region
    $region10: #{final_attention_qkv.1} parent=1 // pred_check
      _
    $region11: #{final_attention_qkv.1} parent=1 // pred_check_branch
      %19 = sbr.rel (0) target = $region13
    $region12: #{final_attention_qkv.1} parent=1 // pred_region
      _
    $region13: #{final_attention_qkv.1} parent=1 // pred_fallthru
      _
    // Predicated region
    $region14: #{final_attention_qkv.1} parent=1 // pred_check
      _
    $region15: #{final_attention_qkv.1} parent=1 // pred_check_branch
      %21 = sbr.rel (0) target = $region17
    $region16: #{final_attention_qkv.1} parent=1 // pred_region
      _
    $region17: #{final_attention_qkv.1} parent=1 // pred_fallthru
      _
    // Predicated region
    $region18: #{final_attention_qkv.1} parent=1 // pred_check
      _
    $region19: #{final_attention_qkv.1} parent=1 // pred_check_branch
      %23 = sbr.rel (0) target = $region21
    $region20: #{final_attention_qkv.1} parent=1 // pred_region
      _
    $region21: #{final_attention_qkv.1} parent=1 // pred_fallthru
      _
    %v25 = vld [vmem:[%s0] sm:$0xff]
    %v26 = vld [vmem:[%s0 + $0x8] sm:$0xff]
    %v27 = vld [vmem:[%s0 + $0x10] sm:$0xff]
    %v28 = vld [vmem:[%s0 + $0x18] sm:$0xff]
    %v29 = vpack.c.bf16 %v25, %v25
    %v30 = vpack.c.bf16 %v26, %v26
    %v31 = vpack.c.bf16 %v27, %v27
    %v32 = vpack.c.bf16 %v28, %v28
    %vm33 = vcmask 261120
    %v34 = vsel %vm33, %v25, 0.0
    %v35 = vrot.slane %v34, 4
    %v36 = vadd.f32 %v34, %v35
    %v37 = vrot.slane %v36, 2
    %v38 = vadd.f32 %v36, %v37
    %v39 = vrot.slane %v38, 1
    %v40 = vadd.f32 %v38, %v39
    %v41 = vsel %vm33, %v26, 0.0
    %v42 = vrot.slane %v41, 4
    %v43 = vadd.f32 %v41, %v42
    %v44 = vrot.slane %v43, 2
    %v45 = vadd.f32 %v43, %v44
    %v46 = vrot.slane %v45, 1
    %v47 = vadd.f32 %v45, %v46
    %v48 = vsel %vm33, %v27, 0.0
    %v49 = vrot.slane %v48, 4
    %v50 = vadd.f32 %v48, %v49
    %v51 = vrot.slane %v50, 2
    %v52 = vadd.f32 %v50, %v51
    %v53 = vrot.slane %v52, 1
    %v54 = vadd.f32 %v52, %v53
    %v55 = vsel %vm33, %v28, 0.0
    %v56 = vrot.slane %v55, 4
    %v57 = vadd.f32 %v55, %v56
    %v58 = vrot.slane %v57, 2
    %v59 = vadd.f32 %v57, %v58
    %v60 = vrot.slane %v59, 1
    %v61 = vadd.f32 %v59, %v60
    %v62 = vrcp.pop 8.0
    %v63 = vmul.f32 %v40, %v62
    %v64 = vmul.f32 %v47, %v62
    %v65 = vmul.f32 %v54, %v62
    %v66 = vmul.f32 %v61, %v62
    %v67 = vpack.c.bf16 %v63, %v63
    %v68 = vpack.c.bf16 %v64, %v64
    %v69 = vpack.c.bf16 %v65, %v65
    %v70 = vpack.c.bf16 %v66, %v66
    %v71 = vld [vmem:[%s1] sm:$0xf]
    %v72 = vld [vmem:[%s1 + $0x4] sm:$0xf]
    %v73 = vld [vmem:[%s1 + $0x8] sm:$0xf]
    %v74 = vld [vmem:[%s1 + $0xc] sm:$0xf]
    %v75 = vld [vmem:[%s2] sm:$0x1]
    %v77 = vlaneseq
    %v78 = vshrl.u32 %v77, 7
    %v79 = vsub.s32 0, %v78
    %v80 = vrot.slane %v75, %v79
    %v86 = vunpack.c.l.b16 %v67
    %v87 = vunpack.c.l.b16 %v68
    %v88 = vunpack.c.l.b16 %v69
    %v89 = vunpack.c.l.b16 %v70
    %vm90 = vcmask 1041409
    %v91 = vsel %vm90, %v87, %v86
    %vm92 = vcmask 1042434
    %v93 = vsel %vm92, %v88, %v91
    %vm94 = vcmask 1043459
    %v95 = vsel %vm94, %v89, %v93
    %v96 = vpack.c.b16 %v95, %v95
    %v101 = vunpack.c.l.b16 %v71
    %v102 = vunpack.c.l.b16 %v72
    %v103 = vunpack.c.l.b16 %v73
    %v104 = vunpack.c.l.b16 %v74
    %v105 = vpack.c.b16 %v102, %v101
    %v106 = vpack.c.b16 %v104, %v103
    %v110 = vsel %vm33, %v96, 0
    %112 = vmatprep.subr.bf16.mxu0 0
    %113 = vmatpush1.bf16.msra.mxu0 %v105
    %114 = vmatprep.subr.bf16.mxu0 0
    %115 = vmatpush1.bf16.msra.mxu0 %v106
    %116 = vmatprep.subr.bf16.mxu0 0
    %117 = vmatpush1.bf16.msra.mxu0 0
    %118 = vmatprep.subr.bf16.mxu0 0
    %119 = vmatpush1.bf16.msra.mxu0 0
    %120 = vmatprep.subr.bf16.mxu0 0
    %121 = vmatpush1.bf16.msra.mxu0 0
    %122 = vmatprep.subr.bf16.mxu0 0
    %123 = vmatpush1.bf16.msra.mxu0 0
    %124 = vmatprep.subr.bf16.mxu0 0
    %125 = vmatpush1.bf16.msra.mxu0 0
    %126 = vmatprep.subr.bf16.mxu0 0
    %127 = vmatpush1.bf16.msra.mxu0 0
    %128 = vmatprep.subr.bf16.mxu0 0
    %129 = vmatpush1.bf16.msra.mxu0 0
    %130 = vmatprep.subr.bf16.mxu0 0
    %131 = vmatpush1.bf16.msra.mxu0 0
    %132 = vmatprep.subr.bf16.mxu0 0
    %133 = vmatpush1.bf16.msra.mxu0 0
    %134 = vmatprep.subr.bf16.mxu0 0
    %135 = vmatpush1.bf16.msra.mxu0 0
    %136 = vmatprep.subr.bf16.mxu0 0
    %137 = vmatpush1.bf16.msra.mxu0 0
    %138 = vmatprep.subr.bf16.mxu0 0
    %139 = vmatpush1.bf16.msra.mxu0 0
    %140 = vmatprep.subr.bf16.mxu0 0
    %141 = vmatpush1.bf16.msra.mxu0 0
    %142 = vmatprep.subr.bf16.mxu0 0
    %143 = vmatpush1.bf16.msra.mxu0 0
    %144 = vmatprep.mubr.bf16.mxu0 0
    %145 = vmatmul.mubr.bf16.gmra.mrb[0].mxu0 %v110
    %v146 = vpop.f32.mrb[0].mxu0
    %v147 = vadd.f32 %v80, %v146
    %v148 = vpop.f32.mrb[0].mxu0
    %v149 = vpop.f32.mrb[0].mxu0
    %v150 = vpop.f32.mrb[0].mxu0
    %151 = vdwg.mxu0
    %v152 = vld [vmem:[%s3] sm:$0xff]
    %v153 = vld [vmem:[%s3 + $0x8] sm:$0xff]
    %v154 = vld [vmem:[%s3 + $0x10] sm:$0xff]
    %v155 = vld [vmem:[%s3 + $0x18] sm:$0xff]
    %v156 = vld [vmem:[%s4] sm:$0x3]
    %v158 = vlaneseq
    %v159 = vshrl.u32 %v158, 7
    %v160 = vsub.s32 0, %v159
    %v161 = vrot.slane %v156, %v160
    %v162 = vlaneseq
    %v163 = vshrl.u32 %v162, 7
    %v164 = vsub.s32 1, %v163
    %v165 = vrot.slane %v156, %v164
    %v172 = vunpack.c.l.b16 %v29
    %v173 = vunpack.c.l.b16 %v30
    %v174 = vunpack.c.l.b16 %v31
    %v175 = vunpack.c.l.b16 %v32
    %v176 = vpack.c.b16 %v173, %v172
    %v177 = vpack.c.b16 %v175, %v174
    %v182 = vunpack.c.l.b16 %v152
    %v183 = vunpack.c.h.b16 %v152
    %v184 = vunpack.c.l.b16 %v153
    %v185 = vunpack.c.h.b16 %v153
    %v186 = vunpack.c.l.b16 %v154
    %v187 = vunpack.c.h.b16 %v154
    %v188 = vunpack.c.l.b16 %v155
    %v189 = vunpack.c.h.b16 %v155
    %v190 = vpack.c.b16 %v184, %v182
    %v191 = vpack.c.b16 %v185, %v183
    %v192 = vpack.c.b16 %v188, %v186
    %v193 = vpack.c.b16 %v189, %v187
    %v199 = vsel %vm33, %v176, 0
    %v202 = vsel %vm33, %v177, 0
    %204 = vmatprep.subr.bf16.mxu0 %v191
    %205 = vmatpush1.bf16.msra.mxu0 %v190
    %206 = vmatprep.subr.bf16.mxu0 %v193
    %207 = vmatpush1.bf16.msra.mxu0 %v192
    %208 = vmatprep.subr.bf16.mxu0 0
    %209 = vmatpush1.bf16.msra.mxu0 0
    %210 = vmatprep.subr.bf16.mxu0 0
    %211 = vmatpush1.bf16.msra.mxu0 0
    %212 = vmatprep.subr.bf16.mxu0 0
    %213 = vmatpush1.bf16.msra.mxu0 0
    %214 = vmatprep.subr.bf16.mxu0 0
    %215 = vmatpush1.bf16.msra.mxu0 0
    %216 = vmatprep.subr.bf16.mxu0 0
    %217 = vmatpush1.bf16.msra.mxu0 0
    %218 = vmatprep.subr.bf16.mxu0 0
    %219 = vmatpush1.bf16.msra.mxu0 0
    %220 = vmatprep.subr.bf16.mxu0 0
    %221 = vmatpush1.bf16.msra.mxu0 0
    %222 = vmatprep.subr.bf16.mxu0 0
    %223 = vmatpush1.bf16.msra.mxu0 0
    %224 = vmatprep.subr.bf16.mxu0 0
    %225 = vmatpush1.bf16.msra.mxu0 0
    %226 = vmatprep.subr.bf16.mxu0 0
    %227 = vmatpush1.bf16.msra.mxu0 0
    %228 = vmatprep.subr.bf16.mxu0 0
    %229 = vmatpush1.bf16.msra.mxu0 0
    %230 = vmatprep.subr.bf16.mxu0 0
    %231 = vmatpush1.bf16.msra.mxu0 0
    %232 = vmatprep.subr.bf16.mxu0 0
    %233 = vmatpush1.bf16.msra.mxu0 0
    %234 = vmatprep.subr.bf16.mxu0 0
    %235 = vmatpush1.bf16.msra.mxu0 0
    %236 = vmatprep.mubr.bf16.mxu0 0
    %237 = vmatmul.mubr.bf16.gmra.mrb[0].mxu0 %v199
    %v238 = vpop.f32.mrb[0].mxu0
    %v239 = vadd.f32 %v161, %v238
    %v240 = vpop.f32.mrb[0].mxu0
    %v241 = vadd.f32 %v165, %v240
    %v242 = vpop.f32.mrb[0].mxu0
    %v243 = vadd.f32 %v161, %v242
    %v244 = vpop.f32.mrb[0].mxu0
    %v245 = vadd.f32 %v165, %v244
    %246 = vmatprep.mubr.bf16.mxu0 0
    %247 = vmatmul.mubr.bf16.gmra.mrb[0].mxu0 %v202
    %v248 = vpop.f32.mrb[0].mxu0
    %v249 = vadd.f32 %v161, %v248
    %v250 = vpop.f32.mrb[0].mxu0
    %v251 = vadd.f32 %v165, %v250
    %v252 = vpop.f32.mrb[0].mxu0
    %v253 = vadd.f32 %v161, %v252
    %v254 = vpop.f32.mrb[0].mxu0
    %v255 = vadd.f32 %v165, %v254
    %256 = vdwg.mxu0
    %v259 = vunpack.c.l.s4 1966171168
    %v260 = vunpack.c.0.s8 %v259
    %v261 = vlaneseq
    %v262 = vshrl.u32 %v261, 7
    %v263 = vsub.s32 %v260, %v262
    %v264 = vrot.slane %v147, %v263
    %v265 = vcombine.high %v264, %v264
    %v267 = vunpack.c.l.s4 1966171168
    %v268 = vunpack.c.0.s8 %v267
    %v269 = vlaneseq
    %v270 = vshrl.u32 %v269, 7
    %v271 = vsub.s32 %v268, %v270
    %v272 = vrot.slane %v264, %v271
    %v274 = vunpack.c.l.s4 1966171168
    %v275 = vunpack.c.0.s8 %v274
    %v276 = vlaneseq
    %v277 = vshrl.u32 %v276, 7
    %v278 = vsub.s32 %v275, %v277
    %v279 = vrot.slane %v265, %v278
    %v280 = vcombine.high %v272, %v272
    %v281 = vcombine.high %v279, %v279
    %v282 = vlaneseq
    %v283 = vshrl.u32 %v282, 7
    %v284 = vsub.s32 0, %v283
    %v285 = vrot.slane %v272, %v284
    %v286 = vlaneseq
    %v287 = vshrl.u32 %v286, 7
    %v288 = vsub.s32 0, %v287
    %v289 = vrot.slane %v279, %v288
    %v290 = vlaneseq
    %v291 = vshrl.u32 %v290, 7
    %v292 = vsub.s32 0, %v291
    %v293 = vrot.slane %v280, %v292
    %v294 = vlaneseq
    %v295 = vshrl.u32 %v294, 7
    %v296 = vsub.s32 0, %v295
    %v297 = vrot.slane %v281, %v296
    %v302 = vmul.f32 %v239, %v285
    %v303 = vmul.f32 %v243, %v289
    %v304 = vmul.f32 %v249, %v293
    %v305 = vmul.f32 %v253, %v297
    %306 = vadd.xlane.f32.xlu0 %v302
    %v307 = vpop.xlane.xlu0 %306
    %308 = vadd.xlane.f32.xlu0 %v303
    %v309 = vpop.xlane.xlu0 %308
    %310 = vadd.xlane.f32.xlu0 %v304
    %v311 = vpop.xlane.xlu0 %310
    %312 = vadd.xlane.f32.xlu0 %v305
    %v313 = vpop.xlane.xlu0 %312
    %v318 = vlaneseq
    %v319 = vand.u32 %v318, 127
    %v320 = vlaneseq
    %v321 = vshrl.u32 %v320, 7
    %v322 = vsub.s32 %v319, %v321
    %v323 = vrot.slane %v307, %v322
    %v324 = vlaneseq
    %v325 = vshrl.u32 %v324, 7
    %v326 = vsub.s32 %v319, %v325
    %v327 = vrot.slane %v309, %v326
    %v328 = vlaneseq
    %v329 = vshrl.u32 %v328, 7
    %v330 = vsub.s32 %v319, %v329
    %v331 = vrot.slane %v311, %v330
    %v332 = vlaneseq
    %v333 = vshrl.u32 %v332, 7
    %v334 = vsub.s32 %v319, %v333
    %v335 = vrot.slane %v313, %v334
    %v336 = vsel %vm90, %v327, %v323
    %v337 = vsel %vm92, %v331, %v336
    %v338 = vsel %vm94, %v335, %v337
    %vm340 = vcmask 60416
    %v341 = vsel %vm340, %v338, -inf
    %342 = vmax.xlane.f32.xlu0 %v341
    %v343 = vpop.xlane.xlu0 %342
    %v345 = vlaneseq
    %v346 = vshrl.u32 %v345, 7
    %v347 = vsub.s32 0, %v346
    %v348 = vrot.slane %v343, %v347
    %v349 = vlaneseq
    %v350 = vshrl.u32 %v349, 7
    %v351 = vsub.s32 1, %v350
    %v352 = vrot.slane %v343, %v351
    %v353 = vlaneseq
    %v354 = vshrl.u32 %v353, 7
    %v355 = vsub.s32 2, %v354
    %v356 = vrot.slane %v343, %v355
    %v357 = vlaneseq
    %v358 = vshrl.u32 %v357, 7
    %v359 = vsub.s32 3, %v358
    %v360 = vrot.slane %v343, %v359
    %v365 = vsub.f32 %v307, %v348
    %v366 = vsub.f32 %v309, %v352
    %v367 = vsub.f32 %v311, %v356
    %v368 = vsub.f32 %v313, %v360
    %v369 = vmul.f32 %v365, 1.442695
    %v370 = vpow.pop %v369
    %v371 = vmul.f32 %v366, 1.442695
    %v372 = vpow.pop %v371
    %v373 = vmul.f32 %v367, 1.442695
    %v374 = vpow.pop %v373
    %v375 = vmul.f32 %v368, 1.442695
    %v376 = vpow.pop %v375
    %381 = vset.pattern.permute.xlu0 0
    %382 = vperm.xlu0 %381, %v370
    %v383 = vpop.permute.xlu0 %382
    %384 = vset.pattern.permute.xlu0 0
    %385 = vperm.xlu0 %384, %v372
    %v386 = vpop.permute.xlu0 %385
    %387 = vset.pattern.permute.xlu0 0
    %388 = vperm.xlu0 %387, %v374
    %v389 = vpop.permute.xlu0 %388
    %390 = vset.pattern.permute.xlu0 0
    %391 = vperm.xlu0 %390, %v376
    %v392 = vpop.permute.xlu0 %391
    %v393 = vlaneseq
    %v394 = vshrl.u32 %v393, 7
    %v395 = vsub.s32 %v319, %v394
    %v396 = vrot.slane %v383, %v395
    %v397 = vlaneseq
    %v398 = vshrl.u32 %v397, 7
    %v399 = vsub.s32 %v319, %v398
    %v400 = vrot.slane %v386, %v399
    %v401 = vlaneseq
    %v402 = vshrl.u32 %v401, 7
    %v403 = vsub.s32 %v319, %v402
    %v404 = vrot.slane %v389, %v403
    %v405 = vlaneseq
    %v406 = vshrl.u32 %v405, 7
    %v407 = vsub.s32 %v319, %v406
    %v408 = vrot.slane %v392, %v407
    %v409 = vsel %vm90, %v400, %v396
    %v410 = vsel %vm92, %v404, %v409
    %v411 = vsel %vm94, %v408, %v410
    %v413 = vsel %vm340, %v411, 0.0
    %414 = vadd.xlane.f32.xlu0 %v413
    %v415 = vpop.xlane.xlu0 %414
    %v416 = vrcp.pop %v415
    %v417 = vmul.f32 %v415, %v416
    %v418 = vsub.f32 2.0, %v417
    %v419 = vmul.f32 %v416, %v418
    %v421 = vlaneseq
    %v422 = vshrl.u32 %v421, 7
    %v423 = vsub.s32 0, %v422
    %v424 = vrot.slane %v419, %v423
    %v425 = vlaneseq
    %v426 = vshrl.u32 %v425, 7
    %v427 = vsub.s32 1, %v426
    %v428 = vrot.slane %v419, %v427
    %v429 = vlaneseq
    %v430 = vshrl.u32 %v429, 7
    %v431 = vsub.s32 2, %v430
    %v432 = vrot.slane %v419, %v431
    %v433 = vlaneseq
    %v434 = vshrl.u32 %v433, 7
    %v435 = vsub.s32 3, %v434
    %v436 = vrot.slane %v419, %v435
    %v441 = vmul.f32 %v370, %v424
    %v442 = vmul.f32 %v372, %v428
    %v443 = vmul.f32 %v374, %v432
    %v444 = vmul.f32 %v376, %v436
    %446 = vset.pattern.permute.xlu0 0
    %447 = vperm.xlu0 %446, %v441
    %v448 = vpop.permute.xlu0 %447
    %451 = vset.pattern.permute.xlu0 0
    %452 = vperm.xlu0 %451, %v442
    %v453 = vpop.permute.xlu0 %452
    %456 = vset.pattern.permute.xlu0 0
    %457 = vperm.xlu0 %456, %v443
    %v458 = vpop.permute.xlu0 %457
    %461 = vset.pattern.permute.xlu0 0
    %462 = vperm.xlu0 %461, %v444
    %v463 = vpop.permute.xlu0 %462
    %v465 = vmul.f32 %v448, %v241
    %v466 = vmul.f32 %v453, %v245
    %v467 = vmul.f32 %v458, %v251
    %v468 = vmul.f32 %v463, %v255
    %v469 = vrot.slane %v465, 4
    %v470 = vadd.f32 %v465, %v469
    %v471 = vrot.slane %v470, 2
    %v472 = vadd.f32 %v470, %v471
    %v473 = vrot.slane %v472, 1
    %v474 = vadd.f32 %v472, %v473
    %v475 = vrot.slane %v466, 4
    %v476 = vadd.f32 %v466, %v475
    %v477 = vrot.slane %v476, 2
    %v478 = vadd.f32 %v476, %v477
    %v479 = vrot.slane %v478, 1
    %v480 = vadd.f32 %v478, %v479
    %v481 = vrot.slane %v467, 4
    %v482 = vadd.f32 %v467, %v481
    %v483 = vrot.slane %v482, 2
    %v484 = vadd.f32 %v482, %v483
    %v485 = vrot.slane %v484, 1
    %v486 = vadd.f32 %v484, %v485
    %v487 = vrot.slane %v468, 4
    %v488 = vadd.f32 %v468, %v487
    %v489 = vrot.slane %v488, 2
    %v490 = vadd.f32 %v488, %v489
    %v491 = vrot.slane %v490, 1
    %v492 = vadd.f32 %v490, %v491
    %v497 = vsel %vm90, %v480, %v474
    %v498 = vsel %vm92, %v486, %v497
    %v499 = vsel %vm94, %v492, %v498
    %501 = vst [vmem:[#allocation2] sm:$0xf] %v499
    %v502 = vlaneseq
    %v503 = vshrl.u32 %v502, 7
    %v504 = vsub.s32 %v319, %v503
    %v505 = vrot.slane %v448, %v504
    %v506 = vlaneseq
    %v507 = vshrl.u32 %v506, 7
    %v508 = vsub.s32 %v319, %v507
    %v509 = vrot.slane %v453, %v508
    %v510 = vlaneseq
    %v511 = vshrl.u32 %v510, 7
    %v512 = vsub.s32 %v319, %v511
    %v513 = vrot.slane %v458, %v512
    %v514 = vlaneseq
    %v515 = vshrl.u32 %v514, 7
    %v516 = vsub.s32 %v319, %v515
    %v517 = vrot.slane %v463, %v516
    %v518 = vsel %vm90, %v509, %v505
    %v519 = vsel %vm92, %v513, %v518
    %v520 = vsel %vm94, %v517, %v519
    %522 = vst.msk [vmem:[#allocation4] sm:$0xf] %vm340, %v520
    // Predicated region
    $region22: #{final_attention_qkv.1} parent=1 // pred_check
      _
    $region23: #{final_attention_qkv.1} parent=1 // pred_check_branch
      %524 = sbr.rel (0) target = $region25
    $region24: #{final_attention_qkv.1} parent=1 // pred_region
      %s526 = ssub.s32 64, 64
      %527 = vsyncadd [#allocation3], %s526
      %s529 = sshll.u32 [#allocation2], 4
      %s530 = int_to_ptr.vmem [resolvable:$true] %s529
      %532 = dma.vmem_to_hbm [thread:$0]  %s530, 64, %s5, [#allocation3]
    $region25: #{final_attention_qkv.1} parent=1 // pred_fallthru
      _
    // Predicated region
    $region26: #{final_attention_qkv.1} parent=1 // pred_check
      _
    $region27: #{final_attention_qkv.1} parent=1 // pred_check_branch
      %534 = sbr.rel (0) target = $region29
    $region28: #{final_attention_qkv.1} parent=1 // pred_region
      %s536 = ssub.s32 64, 64
      %537 = vsyncadd [#allocation5], %s536
      %s539 = sshll.u32 [#allocation4], 4
      %s540 = int_to_ptr.vmem [resolvable:$true] %s539
      %542 = dma.vmem_to_hbm [thread:$0]  %s540, 64, %s6, [#allocation5]
    $region29: #{final_attention_qkv.1} parent=1 // pred_fallthru
      _
    // Predicated region
    $region30: #{final_attention_qkv.1} parent=1 // pred_check
      _
    $region31: #{final_attention_qkv.1} parent=1 // pred_check_branch
      %544 = sbr.rel (0) target = $region33
    $region32: #{final_attention_qkv.1} parent=1 // pred_region
      %545 = dma.done [#allocation3], 64
    $region33: #{final_attention_qkv.1} parent=1 // pred_fallthru
      _
    // Predicated region
    $region34: #{final_attention_qkv.1} parent=1 // pred_check
      _
    $region35: #{final_attention_qkv.1} parent=1 // pred_check_branch
      %547 = sbr.rel (0) target = $region37
    $region36: #{final_attention_qkv.1} parent=1 // pred_region
      %548 = dma.done [#allocation5], 64
    $region37: #{final_attention_qkv.1} parent=1 // pred_fallthru
      _
    %549 = vsyncpa [#allocation3], 1
    %550 = vsyncpa [#allocation5], 1

</llo_original>
